<compile_context>
chip_gen: v7x
topology: tpu7x:2x2x1
jax: 0.10.0
libtpu: 0.0.40
codegen_flags: <defaults>
</compile_context>

<pallas_src>
import functools
import math

import jax
import jax.numpy as jnp
from jax.experimental import pallas as pl
from jax.experimental.pallas import tpu as pltpu


# ----------------------------------------------------------------------------
# Pallas kernel: broadcast add of the positional table over the seq axis
# ----------------------------------------------------------------------------
def _add_pe_kernel(x_ref, pe_ref, o_ref):
    # x_ref: (ts, BE), pe_ref: (1, BE) -> broadcast over the seq tile.
    o_ref[...] = x_ref[...] + pe_ref[...]


def _choose_seq_tile(S, row_bytes, sublane,
                     target_bytes=2 * 1024 * 1024, min_steps=4):
    """Byte-budgeted seq tile.

    - Block bytes (not row count) drive the choice: ~2 MiB blocks hit ~85% of
      HBM roofline and keep 2x(in)+2x(out) double buffers far under the default
      scoped VMEM on v5e (16 MiB), v6e and v7x (32 MiB).
    - Keep >= min_steps grid steps when S allows so pipelining overlaps and the
      'parallel' axis shards across v7x's two TensorCores; never a single step
      unless S itself is smaller than one sublane tile.
    - Result is a multiple of `sublane` (or equals S for tiny inputs) to satisfy
      the (8,128)/(16,128) tiling constraint.
    """
    if S <= sublane:
        return S  # tiny input: single full-dim block (nothing to split)
    # rows per block from the byte budget
    ts = (target_bytes // max(row_bytes, 1)) // sublane * sublane
    # cap so the grid keeps >= min_steps sublane-aligned steps when possible,
    # and at least 2 steps otherwise
    cap = (S // min_steps) // sublane * sublane
    if cap < sublane:
        cap = sublane
    ts = max(sublane, min(ts, cap))
    return min(ts, S)


def positional_encoding_add(x_sbe, pe_be):
    """out[s, b, e] = x[s, b, e] + pe[b, e].

    x_sbe: (S, B, E)
    pe_be: (B, E)  (pe rows selected by batch index, per the module semantics)
    """
    S, B, E = x_sbe.shape
    dtype = x_sbe.dtype
    itemsize = jnp.dtype(dtype).itemsize
    BE = B * E

    x2 = x_sbe.reshape(S, BE)                       # lane-dense 2-D slab
    pe2 = pe_be.reshape(1, BE).astype(dtype)

    # Lane-density guard: output last dim must be a multiple of 128 for
    # unmasked vector stores. Pad (rare) odd shapes, slice back afterwards.
    LANE = 128
    BE_pad = ((BE + LANE - 1) // LANE) * LANE
    if BE_pad != BE:
        x2 = jnp.pad(x2, ((0, 0), (0, BE_pad - BE)))
        pe2 = jnp.pad(pe2, ((0, 0), (0, BE_pad - BE)))

    sublane = 16 if itemsize == 2 else 8            # bf16 packs 2 rows / sublane
    ts = _choose_seq_tile(S, BE_pad * itemsize, sublane)

    grid = (pl.cdiv(S, ts),)
    out = pl.pallas_call(
        _add_pe_kernel,
        out_shape=jax.ShapeDtypeStruct((S, BE_pad), dtype),
        grid=grid,
        in_specs=[
            pl.BlockSpec((ts, BE_pad), lambda i: (i, 0)),
            pl.BlockSpec((1, BE_pad), lambda i: (0, 0)),
        ],
        out_specs=pl.BlockSpec((ts, BE_pad), lambda i: (i, 0)),
        # In-place add: alias x2 (input 0) to the output; removes an extra
        # S*BE-sized HBM allocation (XLA copies first if x has other uses).
        input_output_aliases={0: 0},
        cost_estimate=pl.CostEstimate(
            flops=S * BE_pad,
            transcendentals=0,
            bytes_accessed=2 * S * BE_pad * itemsize + BE_pad * itemsize,
        ),
        compiler_params=pltpu.CompilerParams(
            dimension_semantics=("parallel",),
        ),
    )(x2, pe2)

    if BE_pad != BE:
        out = out[:, :BE]
    return out.reshape(S, B, E)


# ----------------------------------------------------------------------------
# Module: buffer init (plain JAX, done once) + forward
# ----------------------------------------------------------------------------
def make_pe_buffer(max_sequence_length, embedding_dimension):
    """Replicates the registered buffer pe[:, 0, :] of shape (max_seq, emb)."""
    position = jnp.arange(max_sequence_length, dtype=jnp.float32)[:, None]
    div_term = jnp.exp(
        jnp.arange(0, embedding_dimension, 2, dtype=jnp.float32)
        * (-math.log(10000.0) / embedding_dimension)
    )
    pe = jnp.zeros((max_sequence_length, embedding_dimension), jnp.float32)
    pe = pe.at[:, 0::2].set(jnp.sin(position * div_term))
    pe = pe.at[:, 1::2].set(jnp.cos(position * div_term))
    return pe


def positional_encoding_forward(pe_buffer, x_sbe):
    """x_sbe: (seq_len, batch, emb) -> (seq_len, batch, emb).

    Matches the PyTorch module exactly: after the internal transpose, pe is
    sliced with the BATCH size and broadcast over the sequence dimension
    (requires batch <= max_sequence_length, as in the original module).
    """
    S, B, E = x_sbe.shape
    pe_b = pe_buffer[:B]                      # (B, E) — indexed by batch index
    # TODO(synk): training-mode dropout (p=0.1) not implemented; identity at eval.
    return positional_encoding_add(x_sbe, pe_b)


# ----------------------------------------------------------------------------
# Example / self-check
# ----------------------------------------------------------------------------
if __name__ == "__main__":
    key = jax.random.PRNGKey(0)

    max_sequence_length = 64
    embedding_dimension = 128
    seq_len, batch = 16, 2

    pe_buffer = make_pe_buffer(max_sequence_length, embedding_dimension)
    x = jax.random.normal(key, (seq_len, batch, embedding_dimension), jnp.float32)

    fwd = jax.jit(functools.partial(positional_encoding_forward, pe_buffer))
    out = fwd(x)
    jax.block_until_ready(out)

    # Pure-JAX reference of the torch forward (transposes cancel).
    ref = x + pe_buffer[:batch][None, :, :]

    assert out.shape == (seq_len, batch, embedding_dimension), out.shape
    assert jnp.all(jnp.isfinite(out))
    assert jnp.allclose(out, ref, atol=1e-6, rtol=1e-6)
    print("KERNEL_OK")
</pallas_src>

<mosaic_0001>
module attributes {stable_mosaic.version = 11 : i64} {
  func.func @_add_pe_kernel(%arg0: i32, %arg1: memref<8x256xf32, #tpu.memory_space<vmem>>, %arg2: memref<1x256xf32, #tpu.memory_space<vmem>>, %arg3: memref<8x256xf32, #tpu.memory_space<vmem>>) attributes {dimension_semantics = [#tpu.dimension_semantics<parallel>], iteration_bounds = array<i64: 2>, scalar_prefetch = 0 : i64, scratch_operands = 0 : i64, tpu.core_type = #tpu.core_type<tc>, window_params = [{transform_indices = @transform_0, window_bounds = array<i64: 8, 256>}, {pipeline_mode = #tpu.pipeline_mode<synchronous>, transform_indices = @transform_1, window_bounds = array<i64: 1, 256>}, {transform_indices = @transform_2, window_bounds = array<i64: 8, 256>}]} {
    %c0 = arith.constant 0 : index
    %c0_0 = arith.constant 0 : index
    %0 = vector.load %arg1[%c0, %c0_0] : memref<8x256xf32, #tpu.memory_space<vmem>>, vector<8x256xf32>
    %c0_1 = arith.constant 0 : index
    %c0_2 = arith.constant 0 : index
    %1 = vector.load %arg2[%c0_1, %c0_2] : memref<1x256xf32, #tpu.memory_space<vmem>>, vector<1x256xf32>
    %2 = vector.broadcast %1 : vector<1x256xf32> to vector<8x256xf32>
    %3 = arith.addf %0, %2 : vector<8x256xf32>
    %c0_3 = arith.constant 0 : index
    %c0_4 = arith.constant 0 : index
    %4 = vector.load %arg3[%c0_3, %c0_4] : memref<8x256xf32, #tpu.memory_space<vmem>>, vector<8x256xf32>
    tpu.vector_store %arg3[%c0_3, %c0_4], %3 {strides = array<i32>} : memref<8x256xf32, #tpu.memory_space<vmem>>, vector<8x256xf32>,
    return
  }
  func.func @transform_0(%arg0: i32) -> (i32, i32) {
    %c0_i32 = arith.constant 0 : i32
    %c0_i32_0 = arith.constant 0 : i32
    return %arg0, %c0_i32 : i32, i32
  }
  func.func @transform_1(%arg0: i32) -> (i32, i32) {
    %c0_i32 = arith.constant 0 : i32
    %c0_i32_0 = arith.constant 0 : i32
    %c0_i32_1 = arith.constant 0 : i32
    return %c0_i32, %c0_i32_0 : i32, i32
  }
  func.func @transform_2(%arg0: i32) -> (i32, i32) {
    %c0_i32 = arith.constant 0 : i32
    %c0_i32_0 = arith.constant 0 : i32
    return %arg0, %c0_i32 : i32, i32
  }
}

</mosaic_0001>

<llo_original>
// kernel: positional_encoding_forward.1
$region0: #{positional_encoding_forward.1}
  #allocation0 [shape = 'u32[]', space=smem, size = 0x4, offset = 0x4, fixed_abs, tag = 'smem constant byte address 0x4 - core index']
  #allocation1 [shape = 'u32[144,128]{1,0:T(1,128)}', space=vmem, size = 0x12000, scoped, tag = 'internal scratch']
  %s0 = inlined_call_operand.vmem [shape: f32[16,256], index: 0, kind: input, shape index: {}, may-alias: {0,2}]
  %s1 = inlined_call_operand.vmem [shape: f32[1,256], index: 1, kind: input, shape index: {}]
  %s2 = inlined_call_operand.vmem [shape: f32[16,256], index: 2, kind: output, shape index: {}, may-alias: {0,2}]
  %s3 = sld [smem:[#allocation0]]
  $region41: #{positional_encoding_forward.1} parent=0
    _
  %s5 = ssub.s32 1, %s3
  %s6 = scalar_select 0, %s5, %s3
  loop: start=0, step=1, limit=4
  $region2: #{positional_encoding_forward.1} parent=0 // loop_pre_header
    _
  $region3: #{positional_encoding_forward.1} parent=0 // loop_header
    %s8 = sphi 0, %s12
    %p9 = scmp.ge.s32.totalorder %s8, 4
    %s18 = sphi 0, %s20
    %s21 = sphi 0, %s18
    %s22 = sphi 0, %s21
    %s38 = sphi 0, %s22
    %s42 = sphi 0, %s42
    %s44 = sphi 0, %s42
    %s45 = sphi 0, %s44
    %s59 = sphi 0, %s45
    %s65 = sphi 0, %s67
    %s68 = sphi 0, %s65
    %s69 = sphi 0, %s68
    %s85 = sphi 0, %s69
  $region4: #{positional_encoding_forward.1} parent=0 // loop_header_branch
    %11 = sbr.rel (%p9) target = $region8
  $region5: #{positional_encoding_forward.1} parent=0 // loop_body
    %s13 = ssub.s32 %s8, 1
    %s14 = ssub.s32 %s8, 2
    %s15 = sadd.s32 %s8, 1
    %s16 = ssub.s32 %s8, %s15
    %p17 = scmp.eq.s32.totalorder %s16, 0
    %s19 = sadd.s32 %s18, 1
    %s20 = scalar_select %p17, %s18, %s19
    %p23 = pneg %p17
    %p24 = scmp.eq.s32.totalorder %s8, 1
    %p25 = por %p23, %p24
    %p26 = scmp.ne.s32.totalorder %s18, %s21
    %p27 = scmp.eq.s32.totalorder %s8, 0
    %p28 = por %p26, %p27
    %p29 = scmp.ne.s32.totalorder %s18, %s21
    %p30 = scmp.eq.s32.totalorder %s13, 1
    %p31 = por %p29, %p30
    %p32 = scmp.ne.s32.totalorder %s21, %s22
    %p33 = scmp.eq.s32.totalorder %s13, 0
    %p34 = por %p32, %p33
    %p35 = scmp.ne.s32.totalorder %s21, %s22
    %p36 = scmp.eq.s32.totalorder %s14, 1
    %p37 = por %p35, %p36
    %p39 = scmp.ne.s32.totalorder %s22, %s38
    %p40 = scmp.eq.s32.totalorder %s14, 0
    %p41 = por %p39, %p40
    %s43 = sadd.s32 %s42, 1
    %p46 = scmp.eq.s32.totalorder %s8, 1
    %p47 = scmp.ne.s32.totalorder %s42, %s44
    %p48 = scmp.eq.s32.totalorder %s8, 0
    %p49 = por %p47, %p48
    %p50 = scmp.ne.s32.totalorder %s42, %s44
    %p51 = scmp.eq.s32.totalorder %s13, 1
    %p52 = por %p50, %p51
    %p53 = scmp.ne.s32.totalorder %s44, %s45
    %p54 = scmp.eq.s32.totalorder %s13, 0
    %p55 = por %p53, %p54
    %p56 = scmp.ne.s32.totalorder %s44, %s45
    %p57 = scmp.eq.s32.totalorder %s14, 1
    %p58 = por %p56, %p57
    %p60 = scmp.ne.s32.totalorder %s45, %s59
    %p61 = scmp.eq.s32.totalorder %s14, 0
    %p62 = por %p60, %p61
    %s63 = ssub.s32 %s8, %s15
    %p64 = scmp.eq.s32.totalorder %s63, 0
    %s66 = sadd.s32 %s65, 1
    %s67 = scalar_select %p64, %s65, %s66
    %p70 = pneg %p64
    %p71 = scmp.eq.s32.totalorder %s8, 1
    %p72 = por %p70, %p71
    %p73 = scmp.ne.s32.totalorder %s65, %s68
    %p74 = scmp.eq.s32.totalorder %s8, 0
    %p75 = por %p73, %p74
    %p76 = scmp.ne.s32.totalorder %s65, %s68
    %p77 = scmp.eq.s32.totalorder %s13, 1
    %p78 = por %p76, %p77
    %p79 = scmp.ne.s32.totalorder %s68, %s69
    %p80 = scmp.eq.s32.totalorder %s13, 0
    %p81 = por %p79, %p80
    %p82 = scmp.ne.s32.totalorder %s68, %s69
    %p83 = scmp.eq.s32.totalorder %s14, 1
    %p84 = por %p82, %p83
    %p86 = scmp.ne.s32.totalorder %s69, %s85
    %p87 = scmp.eq.s32.totalorder %s14, 0
    %p88 = por %p86, %p87
    %p89 = scmp.le.s32.totalorder 1, %s8
    %p90 = scmp.lt.s32.totalorder %s8, 3
    %p91 = pnand %p89, %p90
    %p92 = pneg %p91
    // Predicated region
    $region9: #{positional_encoding_forward.1} parent=5 // pred_check
      _
    $region10: #{positional_encoding_forward.1} parent=5 // pred_check_branch
      %94 = sbr.rel (%p91) target = $region12
    $region11: #{positional_encoding_forward.1} parent=5 // pred_region
      %s95 = ssub.s32 %s8, 1
      // Predicated region
      $region13: #{positional_encoding_forward.1} parent=11 // pred_check
        %p96 = pneg %p55
      $region14: #{positional_encoding_forward.1} parent=11 // pred_check_branch
        %98 = sbr.rel (%p96) target = $region16
      $region15: #{positional_encoding_forward.1} parent=11 // pred_region
        _
      $region16: #{positional_encoding_forward.1} parent=11 // pred_fallthru
        _
    $region12: #{positional_encoding_forward.1} parent=5 // pred_fallthru
      _
    %p99 = scmp.lt.s32.totalorder %s8, 2
    // Predicated region
    $region17: #{positional_encoding_forward.1} parent=5 // pred_check
      %p100 = pneg %p99
    $region18: #{positional_encoding_forward.1} parent=5 // pred_check_branch
      %102 = sbr.rel (%p100) target = $region20
    $region19: #{positional_encoding_forward.1} parent=5 // pred_region
      // Predicated region
      $region21: #{positional_encoding_forward.1} parent=19 // pred_check
        %p103 = pneg %p28
      $region22: #{positional_encoding_forward.1} parent=19 // pred_check_branch
        %105 = sbr.rel (%p103) target = $region24
      $region23: #{positional_encoding_forward.1} parent=19 // pred_region
        %p106 = scmp.lt.s32.totalorder %s8, 1
        %s107 = scalar_select %p106, %s8, 1
        %s108 = smul.addr %s107, 2
        %s109 = smul.addr %s108, 8
        %s110 = scalar_lea.vmem %s0, %s109
      $region24: #{positional_encoding_forward.1} parent=19 // pred_fallthru
        _
    $region20: #{positional_encoding_forward.1} parent=5 // pred_fallthru
      _
    %p111 = scmp.le.s32.totalorder 1, %s8
    %p112 = scmp.lt.s32.totalorder %s8, 3
    %p113 = pnand %p111, %p112
    %p114 = pneg %p113
    // Predicated region
    $region25: #{positional_encoding_forward.1} parent=5 // pred_check
      _
    $region26: #{positional_encoding_forward.1} parent=5 // pred_check_branch
      %116 = sbr.rel (%p113) target = $region28
    $region27: #{positional_encoding_forward.1} parent=5 // pred_region
      %s117 = ssub.s32 %s8, 1
      %p118 = scmp.lt.s32.totalorder %s13, 1
      %s119 = scalar_select %p118, %s13, 1
      %s120 = smul.addr %s119, 2
      %s121 = smul.addr %s120, 8
      %s122 = scalar_lea.vmem %s0, %s121
      %p123 = pneg %p34
      %p124 = pneg %p31
      %p125 = pneg %p55
      %p126 = pneg %p52
      %p127 = pneg %p81
      %p128 = pneg %p78
      %p129 = scmp.lt.s32.totalorder %s13, 1
      %s130 = scalar_select %p129, %s13, 1
      %s131 = smul.addr %s130, 2
      %s132 = smul.addr %s131, 8
      %s133 = scalar_lea.vmem %s2, %s132
      %p134 = scmp.lt.s32.totalorder %s13, 1
      %s135 = scalar_select %p134, %s13, 1
      %s136 = smul.addr %s135, 2
      %s137 = smul.addr %s136, 8
      %s138 = scalar_lea.vmem %s0, %s137
      %p139 = scmp.lt.s32.totalorder %s13, 1
      %s140 = scalar_select %p139, %s13, 1
      %s141 = smul.addr %s140, 2
      %s142 = smul.addr %s141, 8
      %s143 = scalar_lea.vmem %s2, %s142
      %v144 = vld [vmem:[%s138] sm:$0xff]
      %v145 = vld [vmem:[%s138 + $0x8] sm:$0xff]
      %v146 = vld [vmem:[%s1] sm:$0x3]
      %v148 = vlaneseq
      %v149 = vshrl.u32 %v148, 7
      %v150 = vsub.s32 0, %v149
      %v151 = vrot.slane %v146, %v150
      %v152 = vlaneseq
      %v153 = vshrl.u32 %v152, 7
      %v154 = vsub.s32 1, %v153
      %v155 = vrot.slane %v146, %v154
      %v158 = vadd.f32 %v144, %v151
      %v159 = vadd.f32 %v145, %v155
      %160 = vst [vmem:[%s143] sm:$0xff] %v158
      %161 = vst [vmem:[%s143 + $0x8] sm:$0xff] %v159
      %p162 = scmp.lt.s32.totalorder %s13, 1
      %s163 = scalar_select %p162, %s13, 1
      %s164 = smul.addr %s163, 2
      %s165 = smul.addr %s164, 8
      %s166 = scalar_lea.vmem %s2, %s165
      // Predicated region
      $region29: #{positional_encoding_forward.1} parent=27 // pred_check
        %p167 = pneg %p78
      $region30: #{positional_encoding_forward.1} parent=27 // pred_check_branch
        %169 = sbr.rel (%p167) target = $region32
      $region31: #{positional_encoding_forward.1} parent=27 // pred_region
        _
      $region32: #{positional_encoding_forward.1} parent=27 // pred_fallthru
        _
    $region28: #{positional_encoding_forward.1} parent=5 // pred_fallthru
      _
    %p170 = scmp.le.s32.totalorder 2, %s8
    // Predicated region
    $region33: #{positional_encoding_forward.1} parent=5 // pred_check
      %p171 = pneg %p170
    $region34: #{positional_encoding_forward.1} parent=5 // pred_check_branch
      %173 = sbr.rel (%p171) target = $region36
    $region35: #{positional_encoding_forward.1} parent=5 // pred_region
      %s174 = ssub.s32 %s8, 2
      // Predicated region
      $region37: #{positional_encoding_forward.1} parent=35 // pred_check
        %p175 = pneg %p84
      $region38: #{positional_encoding_forward.1} parent=35 // pred_check_branch
        %177 = sbr.rel (%p175) target = $region40
      $region39: #{positional_encoding_forward.1} parent=35 // pred_region
        %p178 = scmp.lt.s32.totalorder %s14, 1
        %s179 = scalar_select %p178, %s14, 1
        %s180 = smul.addr %s179, 2
        %s181 = smul.addr %s180, 8
        %s182 = scalar_lea.vmem %s2, %s181
      $region40: #{positional_encoding_forward.1} parent=35 // pred_fallthru
        _
    $region36: #{positional_encoding_forward.1} parent=5 // pred_fallthru
      _
  $region6: #{positional_encoding_forward.1} parent=0 // loop_footer
    %s12 = sadd.s32 1, %s8
  $region7: #{positional_encoding_forward.1} parent=0 // loop_footer_branch
    %7 = sbr.rel target = $region3
  $region8: #{positional_encoding_forward.1} parent=0 // loop_exit
    _

</llo_original>
